<compile_context>
chip_gen: v6e
topology: v6e:2x2x1
jax: 0.10.0
libtpu: 0.0.40
codegen_flags: <defaults>
</compile_context>

<pallas_src>
import functools

import jax
import jax.numpy as jnp
from jax.experimental import pallas as pl
from jax.experimental.pallas import tpu as pltpu


def _round_up(x, m):
    return ((x + m - 1) // m) * m


def dense_reward_kernel(states_ref, actions_ref,
                        w1_ref, b1_ref, w2_ref, b2_ref, w3_ref, b3_ref,
                        out_ref):
    # fc1 + relu  (bf16 MXU operands, f32 accumulation, f32 elementwise)
    x = states_ref[...]                                        # (TB, S) f32
    h1 = jnp.dot(x.astype(jnp.bfloat16), w1_ref[...],
                 preferred_element_type=jnp.float32) + b1_ref[...]
    h1 = jnp.maximum(h1, 0.0)
    # fc2 + relu
    h2 = jnp.dot(h1.astype(jnp.bfloat16), w2_ref[...],
                 preferred_element_type=jnp.float32) + b2_ref[...]
    h2 = jnp.maximum(h2, 0.0)
    # fc3
    logits = jnp.dot(h2.astype(jnp.bfloat16), w3_ref[...],
                     preferred_element_type=jnp.float32) + b3_ref[...]
    # gather(1, actions): one-hot select along action axis, reduce over lanes.
    tb, a = logits.shape
    col = jax.lax.broadcasted_iota(jnp.int32, (tb, a), 1)
    onehot = (col == actions_ref[...]).astype(jnp.float32)     # (TB, A)
    out_ref[...] = jnp.sum(logits * onehot, axis=1, keepdims=True)


def dense_reward_forward(states, actions, params, *, tb=512):
    """states: (B, state_size) f32, actions: (B,) int -> (B,) f32."""
    B, S = states.shape
    w1, b1, w2, b2, w3, b3 = params
    F1 = w1.shape[1]
    F2 = w2.shape[1]
    A = w3.shape[1]

    # Batch tile: multiple of 8 sublanes, capped so tiny batches stay tiny.
    tb = min(tb, _round_up(B, 8))
    padded_B = _round_up(B, tb)

    states_p = states.astype(jnp.float32)
    actions_p = actions.astype(jnp.int32)
    if padded_B != B:
        pad = padded_B - B
        states_p = jnp.pad(states_p, ((0, pad), (0, 0)))
        actions_p = jnp.pad(actions_p, (0, pad))        # pad action 0 (valid)
    actions_2d = actions_p.reshape(padded_B, 1)

    # Weights as bf16 MXU operands (cast once here); biases as f32 (1, N) rows.
    w1b = w1.astype(jnp.bfloat16)
    w2b = w2.astype(jnp.bfloat16)
    w3b = w3.astype(jnp.bfloat16)
    b1r = b1.reshape(1, F1).astype(jnp.float32)
    b2r = b2.reshape(1, F2).astype(jnp.float32)
    b3r = b3.reshape(1, A).astype(jnp.float32)

    grid = (padded_B // tb,)

    flops = 2 * padded_B * (S * F1 + F1 * F2 + F2 * A)
    bytes_accessed = (padded_B * S * 4 + padded_B * 4 + padded_B * 4
                      + (S * F1 + F1 * F2 + F2 * A) * 2
                      + (F1 + F2 + A) * 4)
    cost = pl.CostEstimate(flops=flops, transcendentals=0,
                           bytes_accessed=bytes_accessed)

    out = pl.pallas_call(
        dense_reward_kernel,
        out_shape=jax.ShapeDtypeStruct((padded_B, 1), jnp.float32),
        grid=grid,
        in_specs=[
            pl.BlockSpec((tb, S), lambda i: (i, 0)),     # states: tiled on batch
            pl.BlockSpec((tb, 1), lambda i: (i, 0)),     # actions: tiled on batch
            pl.BlockSpec((S, F1), lambda i: (0, 0)),     # w1: resident
            pl.BlockSpec((1, F1), lambda i: (0, 0)),     # b1: resident
            pl.BlockSpec((F1, F2), lambda i: (0, 0)),    # w2: resident
            pl.BlockSpec((1, F2), lambda i: (0, 0)),     # b2: resident
            pl.BlockSpec((F2, A), lambda i: (0, 0)),     # w3: resident
            pl.BlockSpec((1, A), lambda i: (0, 0)),      # b3: resident
        ],
        out_specs=pl.BlockSpec((tb, 1), lambda i: (i, 0)),
        compiler_params=pltpu.CompilerParams(
            dimension_semantics=("parallel",)),
        cost_estimate=cost,
    )(states_p, actions_2d, w1b, b1r, w2b, b2r, w3b, b3r)

    return out[:B, 0]   # drop batch padding + squeeze(1)


def init_params(key, state_size, action_size, fc1_units=256, fc2_units=128):
    """Deterministic init mimicking nn.Linear default (uniform +/- 1/sqrt(fan_in))."""
    ks = jax.random.split(key, 6)

    def lin(kw, kb, fan_in, fan_out):
        bound = 1.0 / jnp.sqrt(fan_in)
        w = jax.random.uniform(kw, (fan_in, fan_out), jnp.float32, -bound, bound)
        b = jax.random.uniform(kb, (fan_out,), jnp.float32, -bound, bound)
        return w, b

    w1, b1 = lin(ks[0], ks[1], state_size, fc1_units)
    w2, b2 = lin(ks[2], ks[3], fc1_units, fc2_units)
    w3, b3 = lin(ks[4], ks[5], fc2_units, action_size)
    return (w1, b1, w2, b2, w3, b3)


def reference_forward(states, actions, params):
    # Pure-f32 reference matching the PyTorch module semantics.
    w1, b1, w2, b2, w3, b3 = params
    x = jnp.maximum(states @ w1 + b1, 0.0)
    x = jnp.maximum(x @ w2 + b2, 0.0)
    x = x @ w3 + b3
    return jnp.take_along_axis(x, actions[:, None].astype(jnp.int32), axis=1)[:, 0]


if __name__ == "__main__":
    key = jax.random.PRNGKey(0)
    STATE, ACTION = 32, 4
    k_s, k_a, k_p = jax.random.split(key, 3)
    params = init_params(k_p, STATE, ACTION)

    # Tolerance is relaxed vs the f32 reference because the kernel uses bf16
    # MXU operands (f32 accumulation); error is well under 1e-2 at these scales.
    TOL = dict(atol=3e-2, rtol=3e-2)

    # Small case (single grid step).
    B = 8
    states = jax.random.normal(k_s, (B, STATE), jnp.float32)
    actions = jax.random.randint(k_a, (B,), 0, ACTION, jnp.int32)
    out = dense_reward_forward(states, actions, params)
    jax.block_until_ready(out)
    ref = reference_forward(states, actions, params)
    assert out.shape == (B,), out.shape
    assert jnp.allclose(out, ref, **TOL), (out, ref)

    # Larger case exercising multi-step batch grid + padding (B=40, TB=16 -> 3 steps).
    B2 = 40
    states2 = jax.random.normal(jax.random.fold_in(k_s, 1), (B2, STATE), jnp.float32)
    actions2 = jax.random.randint(jax.random.fold_in(k_a, 1), (B2,), 0, ACTION, jnp.int32)
    out2 = dense_reward_forward(states2, actions2, params, tb=16)
    jax.block_until_ready(out2)
    ref2 = reference_forward(states2, actions2, params)
    assert out2.shape == (B2,), out2.shape
    assert jnp.allclose(out2, ref2, **TOL), (out2, ref2)

    print("KERNEL_OK")
</pallas_src>

<mosaic_0001>
module attributes {stable_mosaic.version = 11 : i64} {
  func.func @dense_reward_kernel(%arg0: i32, %arg1: memref<8x32xf32, #tpu.memory_space<vmem>>, %arg2: memref<8x1xi32, #tpu.memory_space<vmem>>, %arg3: memref<32x256xbf16, #tpu.memory_space<vmem>>, %arg4: memref<1x256xf32, #tpu.memory_space<vmem>>, %arg5: memref<256x128xbf16, #tpu.memory_space<vmem>>, %arg6: memref<1x128xf32, #tpu.memory_space<vmem>>, %arg7: memref<128x4xbf16, #tpu.memory_space<vmem>>, %arg8: memref<1x4xf32, #tpu.memory_space<vmem>>, %arg9: memref<8x1xf32, #tpu.memory_space<vmem>>) attributes {dimension_semantics = [#tpu.dimension_semantics<parallel>], iteration_bounds = array<i64: 1>, scalar_prefetch = 0 : i64, scratch_operands = 0 : i64, tpu.core_type = #tpu.core_type<tc>, window_params = [{transform_indices = @transform_0, window_bounds = array<i64: 8, 32>}, {transform_indices = @transform_1, window_bounds = array<i64: 8, 1>}, {pipeline_mode = #tpu.pipeline_mode<synchronous>, transform_indices = @transform_2, window_bounds = array<i64: 32, 256>}, {pipeline_mode = #tpu.pipeline_mode<synchronous>, transform_indices = @transform_3, window_bounds = array<i64: 1, 256>}, {pipeline_mode = #tpu.pipeline_mode<synchronous>, transform_indices = @transform_4, window_bounds = array<i64: 256, 128>}, {pipeline_mode = #tpu.pipeline_mode<synchronous>, transform_indices = @transform_5, window_bounds = array<i64: 1, 128>}, {pipeline_mode = #tpu.pipeline_mode<synchronous>, transform_indices = @transform_6, window_bounds = array<i64: 128, 4>}, {pipeline_mode = #tpu.pipeline_mode<synchronous>, transform_indices = @transform_7, window_bounds = array<i64: 1, 4>}, {transform_indices = @transform_8, window_bounds = array<i64: 8, 1>}]} {
    %c0 = arith.constant 0 : index
    %c0_0 = arith.constant 0 : index
    %0 = vector.load %arg1[%c0, %c0_0] : memref<8x32xf32, #tpu.memory_space<vmem>>, vector<8x32xf32>
    %1 = arith.truncf %0 : vector<8x32xf32> to vector<8x32xbf16>
    %c0_1 = arith.constant 0 : index
    %c0_2 = arith.constant 0 : index
    %2 = vector.load %arg3[%c0_1, %c0_2] : memref<32x256xbf16, #tpu.memory_space<vmem>>, vector<32x256xbf16>
    %cst = arith.constant dense<0.000000e+00> : vector<8x256xf32>
    %3 = tpu.matmul %1, %2, %cst {dimension_numbers = #tpu.dot_dimension_numbers<[1], [0], [0], [1], [0, 0, 1, 1], [], []>} : vector<8x32xbf16>, vector<32x256xbf16>, vector<8x256xf32> -> vector<8x256xf32>
    %c0_3 = arith.constant 0 : index
    %c0_4 = arith.constant 0 : index
    %4 = vector.load %arg4[%c0_3, %c0_4] : memref<1x256xf32, #tpu.memory_space<vmem>>, vector<1x256xf32>
    %5 = vector.broadcast %4 : vector<1x256xf32> to vector<8x256xf32>
    %6 = arith.addf %3, %5 : vector<8x256xf32>
    %cst_5 = arith.constant 0.000000e+00 : f32
    %7 = vector.broadcast %cst_5 : f32 to vector<8x256xf32>
    %8 = arith.maximumf %6, %7 : vector<8x256xf32>
    %9 = arith.truncf %8 : vector<8x256xf32> to vector<8x256xbf16>
    %c0_6 = arith.constant 0 : index
    %c0_7 = arith.constant 0 : index
    %10 = vector.load %arg5[%c0_6, %c0_7] : memref<256x128xbf16, #tpu.memory_space<vmem>>, vector<256x128xbf16>
    %cst_8 = arith.constant dense<0.000000e+00> : vector<8x128xf32>
    %11 = tpu.matmul %9, %10, %cst_8 {dimension_numbers = #tpu.dot_dimension_numbers<[1], [0], [0], [1], [0, 0, 1, 1], [], []>} : vector<8x256xbf16>, vector<256x128xbf16>, vector<8x128xf32> -> vector<8x128xf32>
    %c0_9 = arith.constant 0 : index
    %c0_10 = arith.constant 0 : index
    %12 = vector.load %arg6[%c0_9, %c0_10] : memref<1x128xf32, #tpu.memory_space<vmem>>, vector<1x128xf32>
    %13 = vector.broadcast %12 : vector<1x128xf32> to vector<8x128xf32>
    %14 = arith.addf %11, %13 : vector<8x128xf32>
    %cst_11 = arith.constant 0.000000e+00 : f32
    %15 = vector.broadcast %cst_11 : f32 to vector<8x128xf32>
    %16 = arith.maximumf %14, %15 : vector<8x128xf32>
    %17 = arith.truncf %16 : vector<8x128xf32> to vector<8x128xbf16>
    %c0_12 = arith.constant 0 : index
    %c0_13 = arith.constant 0 : index
    %18 = vector.load %arg7[%c0_12, %c0_13] : memref<128x4xbf16, #tpu.memory_space<vmem>>, vector<128x4xbf16>
    %cst_14 = arith.constant dense<0.000000e+00> : vector<8x4xf32>
    %19 = tpu.matmul %17, %18, %cst_14 {dimension_numbers = #tpu.dot_dimension_numbers<[1], [0], [0], [1], [0, 0, 1, 1], [], []>} : vector<8x128xbf16>, vector<128x4xbf16>, vector<8x4xf32> -> vector<8x4xf32>
    %c0_15 = arith.constant 0 : index
    %c0_16 = arith.constant 0 : index
    %20 = vector.load %arg8[%c0_15, %c0_16] : memref<1x4xf32, #tpu.memory_space<vmem>>, vector<1x4xf32>
    %21 = vector.broadcast %20 : vector<1x4xf32> to vector<8x4xf32>
    %22 = arith.addf %19, %21 : vector<8x4xf32>
    %23 = tpu.iota {dimensions = array<i32: 1>} : vector<8x4xi32>
    %c0_17 = arith.constant 0 : index
    %c0_18 = arith.constant 0 : index
    %24 = vector.load %arg2[%c0_17, %c0_18] : memref<8x1xi32, #tpu.memory_space<vmem>>, vector<8x1xi32>
    %25 = vector.broadcast %24 : vector<8x1xi32> to vector<8x4xi32>
    %26 = arith.cmpi eq, %23, %25 : vector<8x4xi32>
    %27 = arith.extui %26 : vector<8x4xi1> to vector<8x4xi32>
    %28 = arith.sitofp %27 : vector<8x4xi32> to vector<8x4xf32>
    %29 = arith.mulf %22, %28 : vector<8x4xf32>
    %cst_19 = arith.constant dense<0.000000e+00> : vector<8xf32>
    %30 = vector.multi_reduction <add>, %29, %cst_19 [1] : vector<8x4xf32> to vector<8xf32>
    %31 = vector.shape_cast %30 : vector<8xf32> to vector<8x1xf32>
    %c0_20 = arith.constant 0 : index
    %c0_21 = arith.constant 0 : index
    %32 = vector.load %arg9[%c0_20, %c0_21] : memref<8x1xf32, #tpu.memory_space<vmem>>, vector<8x1xf32>
    tpu.vector_store %arg9[%c0_20, %c0_21], %31 {strides = array<i32>} : memref<8x1xf32, #tpu.memory_space<vmem>>, vector<8x1xf32>,
    return
  }
  func.func @transform_0(%arg0: i32) -> (i32, i32) {
    %c0_i32 = arith.constant 0 : i32
    %c0_i32_0 = arith.constant 0 : i32
    return %arg0, %c0_i32 : i32, i32
  }
  func.func @transform_1(%arg0: i32) -> (i32, i32) {
    %c0_i32 = arith.constant 0 : i32
    %c0_i32_0 = arith.constant 0 : i32
    return %arg0, %c0_i32 : i32, i32
  }
  func.func @transform_2(%arg0: i32) -> (i32, i32) {
    %c0_i32 = arith.constant 0 : i32
    %c0_i32_0 = arith.constant 0 : i32
    %c0_i32_1 = arith.constant 0 : i32
    return %c0_i32, %c0_i32_0 : i32, i32
  }
  func.func @transform_3(%arg0: i32) -> (i32, i32) {
    %c0_i32 = arith.constant 0 : i32
    %c0_i32_0 = arith.constant 0 : i32
    %c0_i32_1 = arith.constant 0 : i32
    return %c0_i32, %c0_i32_0 : i32, i32
  }
  func.func @transform_4(%arg0: i32) -> (i32, i32) {
    %c0_i32 = arith.constant 0 : i32
    %c0_i32_0 = arith.constant 0 : i32
    %c0_i32_1 = arith.constant 0 : i32
    return %c0_i32, %c0_i32_0 : i32, i32
  }
  func.func @transform_5(%arg0: i32) -> (i32, i32) {
    %c0_i32 = arith.constant 0 : i32
    %c0_i32_0 = arith.constant 0 : i32
    %c0_i32_1 = arith.constant 0 : i32
    return %c0_i32, %c0_i32_0 : i32, i32
  }
  func.func @transform_6(%arg0: i32) -> (i32, i32) {
    %c0_i32 = arith.constant 0 : i32
    %c0_i32_0 = arith.constant 0 : i32
    %c0_i32_1 = arith.constant 0 : i32
    return %c0_i32, %c0_i32_0 : i32, i32
  }
  func.func @transform_7(%arg0: i32) -> (i32, i32) {
    %c0_i32 = arith.constant 0 : i32
    %c0_i32_0 = arith.constant 0 : i32
    %c0_i32_1 = arith.constant 0 : i32
    return %c0_i32, %c0_i32_0 : i32, i32
  }
  func.func @transform_8(%arg0: i32) -> (i32, i32) {
    %c0_i32 = arith.constant 0 : i32
    %c0_i32_0 = arith.constant 0 : i32
    return %arg0, %c0_i32 : i32, i32
  }
}

</mosaic_0001>

<llo_original>
// kernel: tpu_custom_call.1
$region0: #{tpu_custom_call.1}
  #allocation0 [shape = 'u32[]', space=smem, size = 0x4, offset = 0x4, fixed_abs, tag = 'smem constant byte address 0x4 - core index']
  #allocation1 [shape = 'u32[144,128]{1,0:T(1,128)}', space=vmem, size = 0x12000, scoped, tag = 'internal scratch']
  %s0 = inlined_call_operand.vmem [shape: f32[8,32], index: 0, kind: input, shape index: {}]
  %s1 = inlined_call_operand.vmem [shape: s32[8,1], index: 1, kind: input, shape index: {}]
  %s2 = inlined_call_operand.vmem [shape: bf16[32,256], index: 2, kind: input, shape index: {}]
  %s3 = inlined_call_operand.vmem [shape: f32[1,256], index: 3, kind: input, shape index: {}]
  %s4 = inlined_call_operand.hbm [shape: bf16[256,128], index: 4, kind: input, shape index: {}]
  %s5 = inlined_call_operand.vmem [shape: f32[1,128], index: 5, kind: input, shape index: {}]
  %s6 = inlined_call_operand.vmem [shape: bf16[128,4], index: 6, kind: input, shape index: {}]
  %s7 = inlined_call_operand.vmem [shape: f32[1,4], index: 7, kind: input, shape index: {}]
  %s8 = inlined_call_operand.vmem [shape: f32[8,1], index: 8, kind: output, shape index: {}]
  %s9 = sld [smem:[#allocation0]]
  $region46: #{tpu_custom_call.1} parent=0
    _
  %s11 = ssub.s32 1, %s9
  %s12 = scalar_select 0, %s11, %s9
  $region1: #{tpu_custom_call.1} parent=0
    #allocation2 [shape = 'u8[65536]{0}', space=vmem, size = 0x10000, scoped, tag = 'input window, operand 4, single buffered']
    #allocation3 [shape = 's32[1]{0}', space=sflag, size = 0x4, scoped, tag = 'scoped memory for tpu_custom_call.1']
    %13 = vsyncpa [#allocation3], 0
    // Predicated region
    $region2: #{tpu_custom_call.1} parent=1 // pred_check
      _
    $region3: #{tpu_custom_call.1} parent=1 // pred_check_branch
      %15 = sbr.rel (0) target = $region5
    $region4: #{tpu_custom_call.1} parent=1 // pred_region
      _
    $region5: #{tpu_custom_call.1} parent=1 // pred_fallthru
      _
    // Predicated region
    $region6: #{tpu_custom_call.1} parent=1 // pred_check
      _
    $region7: #{tpu_custom_call.1} parent=1 // pred_check_branch
      %17 = sbr.rel (0) target = $region9
    $region8: #{tpu_custom_call.1} parent=1 // pred_region
      _
    $region9: #{tpu_custom_call.1} parent=1 // pred_fallthru
      _
    // Predicated region
    $region10: #{tpu_custom_call.1} parent=1 // pred_check
      _
    $region11: #{tpu_custom_call.1} parent=1 // pred_check_branch
      %19 = sbr.rel (0) target = $region13
    $region12: #{tpu_custom_call.1} parent=1 // pred_region
      _
    $region13: #{tpu_custom_call.1} parent=1 // pred_fallthru
      _
    // Predicated region
    $region14: #{tpu_custom_call.1} parent=1 // pred_check
      _
    $region15: #{tpu_custom_call.1} parent=1 // pred_check_branch
      %21 = sbr.rel (0) target = $region17
    $region16: #{tpu_custom_call.1} parent=1 // pred_region
      _
    $region17: #{tpu_custom_call.1} parent=1 // pred_fallthru
      _
    // Predicated region
    $region18: #{tpu_custom_call.1} parent=1 // pred_check
      _
    $region19: #{tpu_custom_call.1} parent=1 // pred_check_branch
      %23 = sbr.rel (0) target = $region21
    $region20: #{tpu_custom_call.1} parent=1 // pred_region
      %s25 = ssub.s32 2048, 2048
      %26 = vsyncadd [#allocation3], %s25
      %s27 = sshll.u32 [#allocation2], 4
      %s28 = int_to_ptr.vmem [resolvable:$true] %s27
      %33 = dma.hbm_to_vmem [thread:$0]  %s4, 2048, %s28, [#allocation3], 64, 64, 4
    $region21: #{tpu_custom_call.1} parent=1 // pred_fallthru
      _
    // Predicated region
    $region22: #{tpu_custom_call.1} parent=1 // pred_check
      _
    $region23: #{tpu_custom_call.1} parent=1 // pred_check_branch
      %35 = sbr.rel (0) target = $region25
    $region24: #{tpu_custom_call.1} parent=1 // pred_region
      _
    $region25: #{tpu_custom_call.1} parent=1 // pred_fallthru
      _
    // Predicated region
    $region26: #{tpu_custom_call.1} parent=1 // pred_check
      _
    $region27: #{tpu_custom_call.1} parent=1 // pred_check_branch
      %37 = sbr.rel (0) target = $region29
    $region28: #{tpu_custom_call.1} parent=1 // pred_region
      _
    $region29: #{tpu_custom_call.1} parent=1 // pred_fallthru
      _
    // Predicated region
    $region30: #{tpu_custom_call.1} parent=1 // pred_check
      _
    $region31: #{tpu_custom_call.1} parent=1 // pred_check_branch
      %39 = sbr.rel (0) target = $region33
    $region32: #{tpu_custom_call.1} parent=1 // pred_region
      _
    $region33: #{tpu_custom_call.1} parent=1 // pred_fallthru
      _
    // Predicated region
    $region34: #{tpu_custom_call.1} parent=1 // pred_check
      _
    $region35: #{tpu_custom_call.1} parent=1 // pred_check_branch
      %41 = sbr.rel (0) target = $region37
    $region36: #{tpu_custom_call.1} parent=1 // pred_region
      %42 = dma.done [#allocation3], 2048
    $region37: #{tpu_custom_call.1} parent=1 // pred_fallthru
      _
    %v44 = vld [vmem:[%s0] sm:$0xff]
    %v45 = vpack.c.bf16 %v44, %v44
    %v46 = vld [vmem:[%s2] sm:$0xff]
    %v47 = vld [vmem:[%s2 + $0x8] sm:$0xff]
    %v48 = vld [vmem:[%s2 + $0x10] sm:$0xff]
    %v49 = vld [vmem:[%s2 + $0x18] sm:$0xff]
    %v50 = vld [vmem:[%s3] sm:$0x3]
    %v52 = vlaneseq
    %v53 = vshrl.u32 %v52, 7
    %v54 = vsub.s32 0, %v53
    %v55 = vrot.slane %v50, %v54
    %v56 = vlaneseq
    %v57 = vshrl.u32 %v56, 7
    %v58 = vsub.s32 1, %v57
    %v59 = vrot.slane %v50, %v58
    %v66 = vunpack.c.l.b16 %v46
    %v67 = vunpack.c.h.b16 %v46
    %v68 = vunpack.c.l.b16 %v47
    %v69 = vunpack.c.h.b16 %v47
    %v70 = vunpack.c.l.b16 %v48
    %v71 = vunpack.c.h.b16 %v48
    %v72 = vunpack.c.l.b16 %v49
    %v73 = vunpack.c.h.b16 %v49
    %v74 = vpack.c.b16 %v68, %v66
    %v75 = vpack.c.b16 %v69, %v67
    %v76 = vpack.c.b16 %v72, %v70
    %v77 = vpack.c.b16 %v73, %v71
    %vm82 = vcmask 261120
    %v84 = vsel %vm82, %v45, 0
    %86 = vmatprep.subr.bf16.mxu0 0
    %87 = vmatpush1.bf16.msra.mxu0 0
    %88 = vmatprep.subr.bf16.mxu0 0
    %89 = vmatpush1.bf16.msra.mxu0 0
    %90 = vmatprep.subr.bf16.mxu0 0
    %91 = vmatpush1.bf16.msra.mxu0 0
    %92 = vmatprep.subr.bf16.mxu0 0
    %93 = vmatpush1.bf16.msra.mxu0 0
    %94 = vmatprep.subr.bf16.mxu0 0
    %95 = vmatpush1.bf16.msra.mxu0 0
    %96 = vmatprep.subr.bf16.mxu0 0
    %97 = vmatpush1.bf16.msra.mxu0 0
    %98 = vmatprep.subr.bf16.mxu0 %v77
    %99 = vmatpush1.bf16.msra.mxu0 %v76
    %100 = vmatprep.subr.bf16.mxu0 %v75
    %101 = vmatpush1.bf16.msra.mxu0 %v74
    %102 = vmatprep.subr.bf16.mxu0 0
    %103 = vmatpush2.bf16.msra.mxu0 0
    %104 = vmatprep.subr.bf16.mxu0 0
    %105 = vmatpush2.bf16.msra.mxu0 0
    %106 = vmatprep.subr.bf16.mxu0 0
    %107 = vmatpush2.bf16.msra.mxu0 0
    %108 = vmatprep.subr.bf16.mxu0 0
    %109 = vmatpush2.bf16.msra.mxu0 0
    %110 = vmatprep.subr.bf16.mxu0 0
    %111 = vmatpush2.bf16.msra.mxu0 0
    %112 = vmatprep.subr.bf16.mxu0 0
    %113 = vmatpush2.bf16.msra.mxu0 0
    %114 = vmatprep.subr.bf16.mxu0 0
    %115 = vmatpush2.bf16.msra.mxu0 0
    %116 = vmatprep.subr.bf16.mxu0 0
    %117 = vmatpush2.bf16.msra.mxu0 0
    %118 = vmatprep.mubr.bf16.mxu0 0
    %119 = vmatmul.mubr.bf16.gmra.mxu0 %v84
    %v120 = vpop.f32.mrf.mxu0
    %v121 = vadd.f32 %v55, %v120
    %v122 = vpop.f32.mrf.mxu0
    %v123 = vadd.f32 %v59, %v122
    %v124 = vpop.f32.mrf.mxu0
    %v125 = vpop.f32.mrf.mxu0
    %126 = vdwg.mxu0
    %v127 = vmax.f32 %v121, 0.0
    %v128 = vmax.f32 %v123, 0.0
    %v129 = vpack.c.bf16 %v127, %v127
    %v130 = vpack.c.bf16 %v128, %v128
    %v131 = vld [vmem:[#allocation2] sm:$0xf]
    %v132 = vld [vmem:[#allocation2 + $0x4] sm:$0xf]
    %v133 = vld [vmem:[#allocation2 + $0x8] sm:$0xf]
    %v134 = vld [vmem:[#allocation2 + $0xc] sm:$0xf]
    %v135 = vld [vmem:[#allocation2 + $0x10] sm:$0xf]
    %v136 = vld [vmem:[#allocation2 + $0x14] sm:$0xf]
    %v137 = vld [vmem:[#allocation2 + $0x18] sm:$0xf]
    %v138 = vld [vmem:[#allocation2 + $0x1c] sm:$0xf]
    %v139 = vld [vmem:[#allocation2 + $0x20] sm:$0xf]
    %v140 = vld [vmem:[#allocation2 + $0x24] sm:$0xf]
    %v141 = vld [vmem:[#allocation2 + $0x28] sm:$0xf]
    %v142 = vld [vmem:[#allocation2 + $0x2c] sm:$0xf]
    %v143 = vld [vmem:[#allocation2 + $0x30] sm:$0xf]
    %v144 = vld [vmem:[#allocation2 + $0x34] sm:$0xf]
    %v145 = vld [vmem:[#allocation2 + $0x38] sm:$0xf]
    %v146 = vld [vmem:[#allocation2 + $0x3c] sm:$0xf]
    %v147 = vld [vmem:[#allocation2 + $0x40] sm:$0xf]
    %v148 = vld [vmem:[#allocation2 + $0x44] sm:$0xf]
    %v149 = vld [vmem:[#allocation2 + $0x48] sm:$0xf]
    %v150 = vld [vmem:[#allocation2 + $0x4c] sm:$0xf]
    %v151 = vld [vmem:[#allocation2 + $0x50] sm:$0xf]
    %v152 = vld [vmem:[#allocation2 + $0x54] sm:$0xf]
    %v153 = vld [vmem:[#allocation2 + $0x58] sm:$0xf]
    %v154 = vld [vmem:[#allocation2 + $0x5c] sm:$0xf]
    %v155 = vld [vmem:[#allocation2 + $0x60] sm:$0xf]
    %v156 = vld [vmem:[#allocation2 + $0x64] sm:$0xf]
    %v157 = vld [vmem:[#allocation2 + $0x68] sm:$0xf]
    %v158 = vld [vmem:[#allocation2 + $0x6c] sm:$0xf]
    %v159 = vld [vmem:[#allocation2 + $0x70] sm:$0xf]
    %v160 = vld [vmem:[#allocation2 + $0x74] sm:$0xf]
    %v161 = vld [vmem:[#allocation2 + $0x78] sm:$0xf]
    %v162 = vld [vmem:[#allocation2 + $0x7c] sm:$0xf]
    %v163 = vld [vmem:[%s5] sm:$0x1]
    %v165 = vlaneseq
    %v166 = vshrl.u32 %v165, 7
    %v167 = vsub.s32 0, %v166
    %v168 = vrot.slane %v163, %v167
    %v202 = vunpack.c.l.b16 %v131
    %v203 = vunpack.c.l.b16 %v132
    %v204 = vunpack.c.l.b16 %v133
    %v205 = vunpack.c.l.b16 %v134
    %v206 = vunpack.c.l.b16 %v135
    %v207 = vunpack.c.l.b16 %v136
    %v208 = vunpack.c.l.b16 %v137
    %v209 = vunpack.c.l.b16 %v138
    %v210 = vunpack.c.l.b16 %v139
    %v211 = vunpack.c.l.b16 %v140
    %v212 = vunpack.c.l.b16 %v141
    %v213 = vunpack.c.l.b16 %v142
    %v214 = vunpack.c.l.b16 %v143
    %v215 = vunpack.c.l.b16 %v144
    %v216 = vunpack.c.l.b16 %v145
    %v217 = vunpack.c.l.b16 %v146
    %v218 = vunpack.c.l.b16 %v147
    %v219 = vunpack.c.l.b16 %v148
    %v220 = vunpack.c.l.b16 %v149
    %v221 = vunpack.c.l.b16 %v150
    %v222 = vunpack.c.l.b16 %v151
    %v223 = vunpack.c.l.b16 %v152
    %v224 = vunpack.c.l.b16 %v153
    %v225 = vunpack.c.l.b16 %v154
    %v226 = vunpack.c.l.b16 %v155
    %v227 = vunpack.c.l.b16 %v156
    %v228 = vunpack.c.l.b16 %v157
    %v229 = vunpack.c.l.b16 %v158
    %v230 = vunpack.c.l.b16 %v159
    %v231 = vunpack.c.l.b16 %v160
    %v232 = vunpack.c.l.b16 %v161
    %v233 = vunpack.c.l.b16 %v162
    %v234 = vpack.c.b16 %v203, %v202
    %v235 = vpack.c.b16 %v205, %v204
    %v236 = vpack.c.b16 %v207, %v206
    %v237 = vpack.c.b16 %v209, %v208
    %v238 = vpack.c.b16 %v211, %v210
    %v239 = vpack.c.b16 %v213, %v212
    %v240 = vpack.c.b16 %v215, %v214
    %v241 = vpack.c.b16 %v217, %v216
    %v242 = vpack.c.b16 %v219, %v218
    %v243 = vpack.c.b16 %v221, %v220
    %v244 = vpack.c.b16 %v223, %v222
    %v245 = vpack.c.b16 %v225, %v224
    %v246 = vpack.c.b16 %v227, %v226
    %v247 = vpack.c.b16 %v229, %v228
    %v248 = vpack.c.b16 %v231, %v230
    %v249 = vpack.c.b16 %v233, %v232
    %266 = vmatprep.subr.bf16.mxu0 0
    %267 = vmatpush1.bf16.msra.mxu0 %v241
    %268 = vmatprep.subr.bf16.mxu0 0
    %269 = vmatpush1.bf16.msra.mxu0 %v240
    %270 = vmatprep.subr.bf16.mxu0 0
    %271 = vmatpush1.bf16.msra.mxu0 %v239
    %272 = vmatprep.subr.bf16.mxu0 0
    %273 = vmatpush1.bf16.msra.mxu0 %v238
    %274 = vmatprep.subr.bf16.mxu0 0
    %275 = vmatpush1.bf16.msra.mxu0 %v237
    %276 = vmatprep.subr.bf16.mxu0 0
    %277 = vmatpush1.bf16.msra.mxu0 %v236
    %278 = vmatprep.subr.bf16.mxu0 0
    %279 = vmatpush1.bf16.msra.mxu0 %v235
    %280 = vmatprep.subr.bf16.mxu0 0
    %281 = vmatpush1.bf16.msra.mxu0 %v234
    %282 = vmatprep.subr.bf16.mxu0 0
    %283 = vmatpush2.bf16.msra.mxu0 %v249
    %284 = vmatprep.subr.bf16.mxu0 0
    %285 = vmatpush2.bf16.msra.mxu0 %v248
    %286 = vmatprep.subr.bf16.mxu0 0
    %287 = vmatpush2.bf16.msra.mxu0 %v247
    %288 = vmatprep.subr.bf16.mxu0 0
    %289 = vmatpush2.bf16.msra.mxu0 %v246
    %290 = vmatprep.subr.bf16.mxu0 0
    %291 = vmatpush2.bf16.msra.mxu0 %v245
    %292 = vmatprep.subr.bf16.mxu0 0
    %293 = vmatpush2.bf16.msra.mxu0 %v244
    %294 = vmatprep.subr.bf16.mxu0 0
    %295 = vmatpush2.bf16.msra.mxu0 %v243
    %296 = vmatprep.subr.bf16.mxu0 0
    %297 = vmatpush2.bf16.msra.mxu0 %v242
    %298 = vmatprep.mubr.bf16.mxu0 %v130
    %299 = vmatmul.mubr.bf16.gmra.mxu0 %v129
    %v300 = vpop.f32.mrf.mxu0
    %v301 = vadd.f32 %v168, %v300
    %v302 = vpop.f32.mrf.mxu0
    %v303 = vpop.f32.mrf.mxu0
    %v304 = vpop.f32.mrf.mxu0
    %305 = vdwg.mxu0
    %v306 = vmax.f32 %v301, 0.0
    %v307 = vpack.c.bf16 %v306, %v306
    %v308 = vld [vmem:[%s6] sm:$0xf]
    %v309 = vld [vmem:[%s6 + $0x4] sm:$0xf]
    %v310 = vld [vmem:[%s6 + $0x8] sm:$0xf]
    %v311 = vld [vmem:[%s6 + $0xc] sm:$0xf]
    %v312 = vld [vmem:[%s6 + $0x10] sm:$0xf]
    %v313 = vld [vmem:[%s6 + $0x14] sm:$0xf]
    %v314 = vld [vmem:[%s6 + $0x18] sm:$0xf]
    %v315 = vld [vmem:[%s6 + $0x1c] sm:$0xf]
    %v316 = vld [vmem:[%s6 + $0x20] sm:$0xf]
    %v317 = vld [vmem:[%s6 + $0x24] sm:$0xf]
    %v318 = vld [vmem:[%s6 + $0x28] sm:$0xf]
    %v319 = vld [vmem:[%s6 + $0x2c] sm:$0xf]
    %v320 = vld [vmem:[%s6 + $0x30] sm:$0xf]
    %v321 = vld [vmem:[%s6 + $0x34] sm:$0xf]
    %v322 = vld [vmem:[%s6 + $0x38] sm:$0xf]
    %v323 = vld [vmem:[%s6 + $0x3c] sm:$0xf]
    %v324 = vld [vmem:[%s7] sm:$0x1]
    %v326 = vlaneseq
    %v327 = vshrl.u32 %v326, 7
    %v328 = vsub.s32 0, %v327
    %v329 = vrot.slane %v324, %v328
    %v347 = vunpack.c.l.b16 %v308
    %v348 = vunpack.c.l.b16 %v309
    %v349 = vunpack.c.l.b16 %v310
    %v350 = vunpack.c.l.b16 %v311
    %v351 = vunpack.c.l.b16 %v312
    %v352 = vunpack.c.l.b16 %v313
    %v353 = vunpack.c.l.b16 %v314
    %v354 = vunpack.c.l.b16 %v315
    %v355 = vunpack.c.l.b16 %v316
    %v356 = vunpack.c.l.b16 %v317
    %v357 = vunpack.c.l.b16 %v318
    %v358 = vunpack.c.l.b16 %v319
    %v359 = vunpack.c.l.b16 %v320
    %v360 = vunpack.c.l.b16 %v321
    %v361 = vunpack.c.l.b16 %v322
    %v362 = vunpack.c.l.b16 %v323
    %v363 = vpack.c.b16 %v348, %v347
    %v364 = vpack.c.b16 %v350, %v349
    %v365 = vpack.c.b16 %v352, %v351
    %v366 = vpack.c.b16 %v354, %v353
    %v367 = vpack.c.b16 %v356, %v355
    %v368 = vpack.c.b16 %v358, %v357
    %v369 = vpack.c.b16 %v360, %v359
    %v370 = vpack.c.b16 %v362, %v361
    %379 = vmatprep.subr.bf16.mxu0 0
    %380 = vmatpush1.bf16.msra.mxu0 %v370
    %381 = vmatprep.subr.bf16.mxu0 0
    %382 = vmatpush1.bf16.msra.mxu0 %v369
    %383 = vmatprep.subr.bf16.mxu0 0
    %384 = vmatpush1.bf16.msra.mxu0 %v368
    %385 = vmatprep.subr.bf16.mxu0 0
    %386 = vmatpush1.bf16.msra.mxu0 %v367
    %387 = vmatprep.subr.bf16.mxu0 0
    %388 = vmatpush1.bf16.msra.mxu0 %v366
    %389 = vmatprep.subr.bf16.mxu0 0
    %390 = vmatpush1.bf16.msra.mxu0 %v365
    %391 = vmatprep.subr.bf16.mxu0 0
    %392 = vmatpush1.bf16.msra.mxu0 %v364
    %393 = vmatprep.subr.bf16.mxu0 0
    %394 = vmatpush1.bf16.msra.mxu0 %v363
    %395 = vmatprep.subr.bf16.mxu0 0
    %396 = vmatpush2.bf16.msra.mxu0 0
    %397 = vmatprep.subr.bf16.mxu0 0
    %398 = vmatpush2.bf16.msra.mxu0 0
    %399 = vmatprep.subr.bf16.mxu0 0
    %400 = vmatpush2.bf16.msra.mxu0 0
    %401 = vmatprep.subr.bf16.mxu0 0
    %402 = vmatpush2.bf16.msra.mxu0 0
    %403 = vmatprep.subr.bf16.mxu0 0
    %404 = vmatpush2.bf16.msra.mxu0 0
    %405 = vmatprep.subr.bf16.mxu0 0
    %406 = vmatpush2.bf16.msra.mxu0 0
    %407 = vmatprep.subr.bf16.mxu0 0
    %408 = vmatpush2.bf16.msra.mxu0 0
    %409 = vmatprep.subr.bf16.mxu0 0
    %410 = vmatpush2.bf16.msra.mxu0 0
    %411 = vmatprep.mubr.bf16.mxu0 0
    %412 = vmatmul.mubr.bf16.gmra.mxu0 %v307
    %v413 = vpop.f32.mrf.mxu0
    %v414 = vadd.f32 %v329, %v413
    %v415 = vpop.f32.mrf.mxu0
    %v416 = vpop.f32.mrf.mxu0
    %v417 = vpop.f32.mrf.mxu0
    %418 = vdwg.mxu0
    %v419 = vlaneseq
    %v420 = vand.u32 %v419, 127
    %v421 = vld [vmem:[%s1] sm:$0xff]
    %422 = vset.pattern.permute.xlu0 0
    %423 = vperm.xlu0 %422, %v421
    %v424 = vpop.permute.xlu0 %423
    %vm425 = vcmp.eq.s32.totalorder %v420, %v424
    %v426 = vsel %vm425, 1, 0
    %v427 = vcvt.s32.f32 %v426
    %v428 = vmul.f32 %v414, %v427
    %vm429 = vcmask 31744
    %v430 = vsel %vm429, %v428, 0.0
    %431 = vadd.xlane.f32.xlu0 %v430
    %v432 = vpop.xlane.xlu0 %431
    %vm433 = vcmask 7168
    %434 = vst.msk [vmem:[%s8] sm:$0xff] %vm433, %v432
    // Predicated region
    $region38: #{tpu_custom_call.1} parent=1 // pred_check
      _
    $region39: #{tpu_custom_call.1} parent=1 // pred_check_branch
      %436 = sbr.rel (0) target = $region41
    $region40: #{tpu_custom_call.1} parent=1 // pred_region
      _
    $region41: #{tpu_custom_call.1} parent=1 // pred_fallthru
      _
    // Predicated region
    $region42: #{tpu_custom_call.1} parent=1 // pred_check
      _
    $region43: #{tpu_custom_call.1} parent=1 // pred_check_branch
      %438 = sbr.rel (0) target = $region45
    $region44: #{tpu_custom_call.1} parent=1 // pred_region
      _
    $region45: #{tpu_custom_call.1} parent=1 // pred_fallthru
      _
    %439 = vsyncpa [#allocation3], 1

</llo_original>
